<compile_context>
chip_gen: v6e
topology: v6e:2x2x1
jax: 0.10.0
libtpu: 0.0.40
codegen_flags: <defaults>
</compile_context>

<pallas_src>
import math
import jax
import jax.numpy as jnp
import numpy as np
from jax.experimental import pallas as pl
from jax.experimental.pallas import tpu as pltpu


def _ltdc_kernel(x_ref, k_ref, h_ref, d_ref, o_ref):
    x = x_ref[...]                                            # (C, H*W) f32, lane-dense
    # low_signal = avg-pool + repeat_interleave + crop, fused into one matmul
    low = jnp.dot(x, k_ref[...], preferred_element_type=jnp.float32)   # (C, H*W)
    # out = (x - low) * h + low * l  ==  x * h + low * (l - h)
    o_ref[...] = x * h_ref[...] + low * d_ref[...]


def _pool_upsample_matrix(size, patch_size):
    """(size, size) matrix M with (M @ v) == repeat_interleave(avg_pool1d(v,
    kernel=stride=ceil(size/p), ceil_mode=True), p)[:size]  (torch semantics)."""
    k = math.ceil(size / patch_size)
    pooled = math.ceil((size - k) / k) + 1                    # ceil_mode output length
    assert patch_size * pooled >= size, (
        "LowThresholdDC only broadcasts correctly when patch_size*pooled >= size "
        "(i.e. spatial size <= patch_size**2 for evenly divisible inputs)")
    A = np.zeros((pooled, size), dtype=np.float32)            # averaging rows
    for q in range(pooled):
        lo = q * k
        hi = min(lo + k, size)
        A[q, lo:hi] = 1.0 / float(hi - lo)                    # clipped divisor (pad=0)
    U = np.zeros((size, pooled), dtype=np.float32)            # repeat_interleave + crop
    for i in range(size):
        U[i, i // patch_size] = 1.0
    return np.asarray(U @ A, dtype=np.float32)


def _kron_low_operator(H, W, patch_size):
    """(H*W, H*W) operator K with low_flat = x_flat @ K (row-major spatial flatten)."""
    Lm = _pool_upsample_matrix(H, patch_size)                 # (H, H)
    Mw = _pool_upsample_matrix(W, patch_size)                 # (W, W)
    # low[h, w] = sum_{i,j} Lm[h, i] * Mw[w, j] * x[i, j]
    # => K[(i, j), (h, w)] = Lm[h, i] * Mw[w, j]
    K = np.einsum("hi,wj->ijhw", Lm, Mw).reshape(H * W, H * W)
    return np.asarray(K, dtype=np.float32)


def low_threshold_dc(x, h, l, patch_size):
    N, C, H, W = x.shape
    HW = H * W
    # TODO(synk): for large spatial sizes (HW >> 2048, e.g. patch_size 16-32) switch to
    # an in-kernel reshape->mean->broadcast pooling variant instead of the O(HW^2)
    # Kronecker matrix (which would dominate HBM traffic / VMEM there).
    K = jnp.asarray(_kron_low_operator(H, W, patch_size))     # (HW, HW), 256 KiB here

    x2 = x.reshape(N, C, HW)                                  # lane-dense spatial slab
    h2 = h.reshape(C, 1).astype(jnp.float32)
    d2 = (l - h).reshape(C, 1).astype(jnp.float32)            # blend uses (l - h)

    out = pl.pallas_call(
        _ltdc_kernel,
        out_shape=jax.ShapeDtypeStruct((N, C, HW), jnp.float32),
        grid=(N,),
        in_specs=[
            pl.BlockSpec((None, C, HW), lambda n: (n, 0, 0)),  # x slab (all channels)
            pl.BlockSpec((HW, HW), lambda n: (0, 0)),          # Kronecker low operator
            pl.BlockSpec((C, 1), lambda n: (0, 0)),            # h  per-channel scale
            pl.BlockSpec((C, 1), lambda n: (0, 0)),            # l - h per-channel scale
        ],
        out_specs=pl.BlockSpec((None, C, HW), lambda n: (n, 0, 0)),
        compiler_params=pltpu.CompilerParams(
            dimension_semantics=("parallel",)),
        cost_estimate=pl.CostEstimate(
            flops=2 * N * C * HW * HW,
            transcendentals=0,
            bytes_accessed=2 * N * C * HW * 4 + HW * HW * 4 + 2 * C * 4),
    )(x2, K, h2, d2)
    return out.reshape(N, C, H, W)


def reference(x, h, l, patch_size):
    """Pure-JAX mirror of the torch forward (exact-division case)."""
    N, C, H, W = x.shape
    kh = math.ceil(H / patch_size)
    kw = math.ceil(W / patch_size)
    ph = math.ceil(H / kh)
    pw = math.ceil(W / kw)
    assert ph * kh == H and pw * kw == W
    xp = x.reshape(N, C, ph, kh, pw, kw).mean(axis=(3, 5))
    low = jnp.repeat(jnp.repeat(xp, patch_size, axis=3),
                     patch_size, axis=2)[:, :, :H, :W]
    return (x - low) * h[None, :, None, None] + low * l[None, :, None, None]


if __name__ == "__main__":
    # Small shapes consistent with the module: the forward only broadcasts when
    # H, W <= patch_size**2, so use patch_size=4 with 16x16 spatial.
    N, C, H, W = 2, 4, 16, 16
    patch_size = 4

    key = jax.random.PRNGKey(0)
    kx, kh, kl = jax.random.split(key, 3)
    x = jax.random.normal(kx, (N, C, H, W), dtype=jnp.float32)
    # Module inits h, l as zeros (which would make the output trivially zero);
    # initialize them deterministically at random so the test is meaningful.
    h = jax.random.normal(kh, (C,), dtype=jnp.float32)
    l = jax.random.normal(kl, (C,), dtype=jnp.float32)

    out = low_threshold_dc(x, h, l, patch_size)
    out = jax.block_until_ready(out)

    ref = reference(x, h, l, patch_size)
    assert out.shape == (N, C, H, W)
    assert jnp.allclose(out, ref, atol=1e-5, rtol=1e-5), (
        float(jnp.max(jnp.abs(out - ref))))
    print("KERNEL_OK")
</pallas_src>

<mosaic_0001>
module attributes {stable_mosaic.version = 11 : i64} {
  func.func @_ltdc_kernel(%arg0: i32, %arg1: memref<1x4x256xf32, #tpu.memory_space<vmem>>, %arg2: memref<256x256xf32, #tpu.memory_space<vmem>>, %arg3: memref<4x1xf32, #tpu.memory_space<vmem>>, %arg4: memref<4x1xf32, #tpu.memory_space<vmem>>, %arg5: memref<1x4x256xf32, #tpu.memory_space<vmem>>) attributes {dimension_semantics = [#tpu.dimension_semantics<parallel>], iteration_bounds = array<i64: 2>, scalar_prefetch = 0 : i64, scratch_operands = 0 : i64, tpu.core_type = #tpu.core_type<tc>, window_params = [{transform_indices = @transform_0, window_bounds = array<i64: 1, 4, 256>}, {pipeline_mode = #tpu.pipeline_mode<synchronous>, transform_indices = @transform_1, window_bounds = array<i64: 256, 256>}, {pipeline_mode = #tpu.pipeline_mode<synchronous>, transform_indices = @transform_2, window_bounds = array<i64: 4, 1>}, {pipeline_mode = #tpu.pipeline_mode<synchronous>, transform_indices = @transform_3, window_bounds = array<i64: 4, 1>}, {transform_indices = @transform_4, window_bounds = array<i64: 1, 4, 256>}]} {
    %c0 = arith.constant 0 : index
    %c0_0 = arith.constant 0 : index
    %c0_1 = arith.constant 0 : index
    %0 = vector.load %arg1[%c0, %c0_0, %c0_1] : memref<1x4x256xf32, #tpu.memory_space<vmem>>, vector<1x4x256xf32>
    %1 = vector.shape_cast %0 : vector<1x4x256xf32> to vector<4x256xf32>
    %c0_2 = arith.constant 0 : index
    %c0_3 = arith.constant 0 : index
    %2 = vector.load %arg2[%c0_2, %c0_3] : memref<256x256xf32, #tpu.memory_space<vmem>>, vector<256x256xf32>
    %cst = arith.constant dense<0.000000e+00> : vector<4x256xf32>
    %3 = tpu.matmul %1, %2, %cst {dimension_numbers = #tpu.dot_dimension_numbers<[1], [0], [0], [1], [0, 0, 1, 1], [], []>} : vector<4x256xf32>, vector<256x256xf32>, vector<4x256xf32> -> vector<4x256xf32>
    %c0_4 = arith.constant 0 : index
    %c0_5 = arith.constant 0 : index
    %4 = vector.load %arg3[%c0_4, %c0_5] : memref<4x1xf32, #tpu.memory_space<vmem>>, vector<4x1xf32>
    %5 = vector.broadcast %4 : vector<4x1xf32> to vector<4x256xf32>
    %6 = arith.mulf %1, %5 : vector<4x256xf32>
    %c0_6 = arith.constant 0 : index
    %c0_7 = arith.constant 0 : index
    %7 = vector.load %arg4[%c0_6, %c0_7] : memref<4x1xf32, #tpu.memory_space<vmem>>, vector<4x1xf32>
    %8 = vector.broadcast %7 : vector<4x1xf32> to vector<4x256xf32>
    %9 = arith.mulf %3, %8 : vector<4x256xf32>
    %10 = arith.addf %6, %9 : vector<4x256xf32>
    %c0_8 = arith.constant 0 : index
    %c0_9 = arith.constant 0 : index
    %c0_10 = arith.constant 0 : index
    %11 = vector.load %arg5[%c0_8, %c0_9, %c0_10] : memref<1x4x256xf32, #tpu.memory_space<vmem>>, vector<1x4x256xf32>
    %12 = vector.shape_cast %11 : vector<1x4x256xf32> to vector<4x256xf32>
    %13 = vector.shape_cast %10 : vector<4x256xf32> to vector<1x4x256xf32>
    tpu.vector_store %arg5[%c0_8, %c0_9, %c0_10], %13 {strides = array<i32>} : memref<1x4x256xf32, #tpu.memory_space<vmem>>, vector<1x4x256xf32>,
    return
  }
  func.func @transform_0(%arg0: i32) -> (i32, i32, i32) {
    %c0_i32 = arith.constant 0 : i32
    %c0_i32_0 = arith.constant 0 : i32
    %c0_i32_1 = arith.constant 0 : i32
    return %arg0, %c0_i32, %c0_i32_0 : i32, i32, i32
  }
  func.func @transform_1(%arg0: i32) -> (i32, i32) {
    %c0_i32 = arith.constant 0 : i32
    %c0_i32_0 = arith.constant 0 : i32
    %c0_i32_1 = arith.constant 0 : i32
    return %c0_i32, %c0_i32_0 : i32, i32
  }
  func.func @transform_2(%arg0: i32) -> (i32, i32) {
    %c0_i32 = arith.constant 0 : i32
    %c0_i32_0 = arith.constant 0 : i32
    %c0_i32_1 = arith.constant 0 : i32
    return %c0_i32, %c0_i32_0 : i32, i32
  }
  func.func @transform_3(%arg0: i32) -> (i32, i32) {
    %c0_i32 = arith.constant 0 : i32
    %c0_i32_0 = arith.constant 0 : i32
    %c0_i32_1 = arith.constant 0 : i32
    return %c0_i32, %c0_i32_0 : i32, i32
  }
  func.func @transform_4(%arg0: i32) -> (i32, i32, i32) {
    %c0_i32 = arith.constant 0 : i32
    %c0_i32_0 = arith.constant 0 : i32
    %c0_i32_1 = arith.constant 0 : i32
    return %arg0, %c0_i32, %c0_i32_0 : i32, i32, i32
  }
}

</mosaic_0001>

<llo_original>
// kernel: tpu_custom_call.1
$region0: #{tpu_custom_call.1}
  #allocation0 [shape = 'u32[]', space=smem, size = 0x4, offset = 0x4, fixed_abs, tag = 'smem constant byte address 0x4 - core index']
  #allocation1 [shape = 'u32[144,128]{1,0:T(1,128)}', space=vmem, size = 0x12000, scoped, tag = 'internal scratch']
  %s0 = inlined_call_operand.hbm [shape: f32[2,4,256], index: 0, kind: input, shape index: {}]
  %s1 = inlined_call_operand.hbm [shape: f32[256,256], index: 1, kind: input, shape index: {}]
  %s2 = inlined_call_operand.vmem [shape: f32[4,1], index: 2, kind: input, shape index: {}]
  %s3 = inlined_call_operand.vmem [shape: f32[4,1], index: 3, kind: input, shape index: {}]
  %s4 = inlined_call_operand.hbm [shape: f32[2,4,256], index: 4, kind: output, shape index: {}]
  %s5 = sld [smem:[#allocation0]]
  $region57: #{tpu_custom_call.1} parent=0
    _
  %s7 = ssub.s32 1, %s5
  %s8 = scalar_select 0, %s7, %s5
  $region1: #{tpu_custom_call.1} parent=0
    #allocation2 [shape = 'u8[8192]{0}', space=vmem, size = 0x2000, scoped, tag = 'input window, operand 0']
    #allocation3 [shape = 's32[2]{0}', space=sflag, size = 0x8, scoped, tag = 'scoped memory for tpu_custom_call.1']
    #allocation4 [shape = 's32[2]{0}', space=sflag, size = 0x8, scoped, tag = 'scoped memory for tpu_custom_call.1']
    #allocation5 [shape = 'u8[262144]{0}', space=vmem, size = 0x40000, scoped, tag = 'input window, operand 1, single buffered']
    #allocation6 [shape = 's32[1]{0}', space=sflag, size = 0x4, scoped, tag = 'scoped memory for tpu_custom_call.1']
    #allocation7 [shape = 'u8[8192]{0}', space=vmem, size = 0x2000, scoped, tag = 'output window, operand 0']
    %9 = vsyncpa [#allocation3], 0
    %s10 = scalar_lea.sflag [#allocation3], 1
    %11 = vsyncpa %s10, 0
    %12 = vsyncpa [#allocation6], 0
    %13 = vsyncpa [#allocation4], 0
    %s14 = scalar_lea.sflag [#allocation4], 1
    %15 = vsyncpa %s14, 0
    loop: start=0, step=1, limit=4
    $region2: #{tpu_custom_call.1} parent=1 // loop_pre_header
      _
    $region3: #{tpu_custom_call.1} parent=1 // loop_header
      %s17 = sphi 0, %s21
      %p18 = scmp.ge.s32.totalorder %s17, 4
      %s27 = sphi 0, %s29
      %s30 = sphi 0, %s27
      %s31 = sphi 0, %s30
      %s47 = sphi 0, %s31
      %s51 = sphi 0, %s51
      %s53 = sphi 0, %s51
      %s54 = sphi 0, %s53
      %s68 = sphi 0, %s54
      %s72 = sphi 0, %s72
      %s74 = sphi 0, %s72
      %s75 = sphi 0, %s74
      %s89 = sphi 0, %s75
      %s93 = sphi 0, %s93
      %s95 = sphi 0, %s93
      %s96 = sphi 0, %s95
      %s110 = sphi 0, %s96
      %s116 = sphi 0, %s118
      %s119 = sphi 0, %s116
      %s120 = sphi 0, %s119
      %s136 = sphi 0, %s120
    $region4: #{tpu_custom_call.1} parent=1 // loop_header_branch
      %20 = sbr.rel (%p18) target = $region8
    $region5: #{tpu_custom_call.1} parent=1 // loop_body
      %s22 = ssub.s32 %s17, 1
      %s23 = ssub.s32 %s17, 2
      %s24 = sadd.s32 %s17, 1
      %s25 = ssub.s32 %s17, %s24
      %p26 = scmp.eq.s32.totalorder %s25, 0
      %s28 = sadd.s32 %s27, 1
      %s29 = scalar_select %p26, %s27, %s28
      %p32 = pneg %p26
      %p33 = scmp.eq.s32.totalorder %s17, 1
      %p34 = por %p32, %p33
      %p35 = scmp.ne.s32.totalorder %s27, %s30
      %p36 = scmp.eq.s32.totalorder %s17, 0
      %p37 = por %p35, %p36
      %p38 = scmp.ne.s32.totalorder %s27, %s30
      %p39 = scmp.eq.s32.totalorder %s22, 1
      %p40 = por %p38, %p39
      %p41 = scmp.ne.s32.totalorder %s30, %s31
      %p42 = scmp.eq.s32.totalorder %s22, 0
      %p43 = por %p41, %p42
      %p44 = scmp.ne.s32.totalorder %s30, %s31
      %p45 = scmp.eq.s32.totalorder %s23, 1
      %p46 = por %p44, %p45
      %p48 = scmp.ne.s32.totalorder %s31, %s47
      %p49 = scmp.eq.s32.totalorder %s23, 0
      %p50 = por %p48, %p49
      %s52 = sadd.s32 %s51, 1
      %p55 = scmp.eq.s32.totalorder %s17, 1
      %p56 = scmp.ne.s32.totalorder %s51, %s53
      %p57 = scmp.eq.s32.totalorder %s17, 0
      %p58 = por %p56, %p57
      %p59 = scmp.ne.s32.totalorder %s51, %s53
      %p60 = scmp.eq.s32.totalorder %s22, 1
      %p61 = por %p59, %p60
      %p62 = scmp.ne.s32.totalorder %s53, %s54
      %p63 = scmp.eq.s32.totalorder %s22, 0
      %p64 = por %p62, %p63
      %p65 = scmp.ne.s32.totalorder %s53, %s54
      %p66 = scmp.eq.s32.totalorder %s23, 1
      %p67 = por %p65, %p66
      %p69 = scmp.ne.s32.totalorder %s54, %s68
      %p70 = scmp.eq.s32.totalorder %s23, 0
      %p71 = por %p69, %p70
      %s73 = sadd.s32 %s72, 1
      %p76 = scmp.eq.s32.totalorder %s17, 1
      %p77 = scmp.ne.s32.totalorder %s72, %s74
      %p78 = scmp.eq.s32.totalorder %s17, 0
      %p79 = por %p77, %p78
      %p80 = scmp.ne.s32.totalorder %s72, %s74
      %p81 = scmp.eq.s32.totalorder %s22, 1
      %p82 = por %p80, %p81
      %p83 = scmp.ne.s32.totalorder %s74, %s75
      %p84 = scmp.eq.s32.totalorder %s22, 0
      %p85 = por %p83, %p84
      %p86 = scmp.ne.s32.totalorder %s74, %s75
      %p87 = scmp.eq.s32.totalorder %s23, 1
      %p88 = por %p86, %p87
      %p90 = scmp.ne.s32.totalorder %s75, %s89
      %p91 = scmp.eq.s32.totalorder %s23, 0
      %p92 = por %p90, %p91
      %s94 = sadd.s32 %s93, 1
      %p97 = scmp.eq.s32.totalorder %s17, 1
      %p98 = scmp.ne.s32.totalorder %s93, %s95
      %p99 = scmp.eq.s32.totalorder %s17, 0
      %p100 = por %p98, %p99
      %p101 = scmp.ne.s32.totalorder %s93, %s95
      %p102 = scmp.eq.s32.totalorder %s22, 1
      %p103 = por %p101, %p102
      %p104 = scmp.ne.s32.totalorder %s95, %s96
      %p105 = scmp.eq.s32.totalorder %s22, 0
      %p106 = por %p104, %p105
      %p107 = scmp.ne.s32.totalorder %s95, %s96
      %p108 = scmp.eq.s32.totalorder %s23, 1
      %p109 = por %p107, %p108
      %p111 = scmp.ne.s32.totalorder %s96, %s110
      %p112 = scmp.eq.s32.totalorder %s23, 0
      %p113 = por %p111, %p112
      %s114 = ssub.s32 %s17, %s24
      %p115 = scmp.eq.s32.totalorder %s114, 0
      %s117 = sadd.s32 %s116, 1
      %s118 = scalar_select %p115, %s116, %s117
      %p121 = pneg %p115
      %p122 = scmp.eq.s32.totalorder %s17, 1
      %p123 = por %p121, %p122
      %p124 = scmp.ne.s32.totalorder %s116, %s119
      %p125 = scmp.eq.s32.totalorder %s17, 0
      %p126 = por %p124, %p125
      %p127 = scmp.ne.s32.totalorder %s116, %s119
      %p128 = scmp.eq.s32.totalorder %s22, 1
      %p129 = por %p127, %p128
      %p130 = scmp.ne.s32.totalorder %s119, %s120
      %p131 = scmp.eq.s32.totalorder %s22, 0
      %p132 = por %p130, %p131
      %p133 = scmp.ne.s32.totalorder %s119, %s120
      %p134 = scmp.eq.s32.totalorder %s23, 1
      %p135 = por %p133, %p134
      %p137 = scmp.ne.s32.totalorder %s120, %s136
      %p138 = scmp.eq.s32.totalorder %s23, 0
      %p139 = por %p137, %p138
      %p140 = scmp.le.s32.totalorder 1, %s17
      %p141 = scmp.lt.s32.totalorder %s17, 3
      %p142 = pnand %p140, %p141
      %p143 = pneg %p142
      // Predicated region
      $region9: #{tpu_custom_call.1} parent=5 // pred_check
        _
      $region10: #{tpu_custom_call.1} parent=5 // pred_check_branch
        %145 = sbr.rel (%p142) target = $region12
      $region11: #{tpu_custom_call.1} parent=5 // pred_region
        %s146 = ssub.s32 %s17, 1
        // Predicated region
        $region13: #{tpu_custom_call.1} parent=11 // pred_check
          %p147 = pneg %p64
        $region14: #{tpu_custom_call.1} parent=11 // pred_check_branch
          %149 = sbr.rel (%p147) target = $region16
        $region15: #{tpu_custom_call.1} parent=11 // pred_region
          %s151 = ssub.s32 8192, 8192
          %152 = vsyncadd [#allocation6], %s151
          %s153 = sshll.u32 [#allocation5], 4
          %s154 = int_to_ptr.vmem [resolvable:$true] %s153
          %159 = dma.hbm_to_vmem [thread:$0]  %s1, 8192, %s154, [#allocation6], 256, 256, 16
        $region16: #{tpu_custom_call.1} parent=11 // pred_fallthru
          _
        // Predicated region
        $region17: #{tpu_custom_call.1} parent=11 // pred_check
          %p160 = pneg %p85
        $region18: #{tpu_custom_call.1} parent=11 // pred_check_branch
          %162 = sbr.rel (%p160) target = $region20
        $region19: #{tpu_custom_call.1} parent=11 // pred_region
          _
        $region20: #{tpu_custom_call.1} parent=11 // pred_fallthru
          _
        // Predicated region
        $region21: #{tpu_custom_call.1} parent=11 // pred_check
          %p163 = pneg %p106
        $region22: #{tpu_custom_call.1} parent=11 // pred_check_branch
          %165 = sbr.rel (%p163) target = $region24
        $region23: #{tpu_custom_call.1} parent=11 // pred_region
          _
        $region24: #{tpu_custom_call.1} parent=11 // pred_fallthru
          _
      $region12: #{tpu_custom_call.1} parent=5 // pred_fallthru
        _
      %p166 = scmp.lt.s32.totalorder %s17, 2
      // Predicated region
      $region25: #{tpu_custom_call.1} parent=5 // pred_check
        %p167 = pneg %p166
      $region26: #{tpu_custom_call.1} parent=5 // pred_check_branch
        %169 = sbr.rel (%p167) target = $region28
      $region27: #{tpu_custom_call.1} parent=5 // pred_region
        // Predicated region
        $region29: #{tpu_custom_call.1} parent=27 // pred_check
          %p170 = pneg %p37
        $region30: #{tpu_custom_call.1} parent=27 // pred_check_branch
          %172 = sbr.rel (%p170) target = $region32
        $region31: #{tpu_custom_call.1} parent=27 // pred_region
          %s173 = sand.u32 %s27, 1
          %s174 = scalar_lea.sflag [#allocation3], %s173
          %s175 = sand.u32 %s27, 1
          %s176 = smul.addr %s175, 8
          %s177 = scalar_lea.vmem [#allocation2], %s176
          %s179 = ssub.s32 128, 128
          %180 = vsyncadd %s174, %s179
          %s181 = smul.addr %s17, 2
          %s182 = smul.addr %s181, 64
          %s183 = scalar_lea.hbm %s0, %s182
          %s185 = sshll.u32 %s177, 4
          %s186 = int_to_ptr.vmem [resolvable:$true] %s185
          %188 = dma.hbm_to_vmem [thread:$0]  %s183, 128, %s186, %s174
        $region32: #{tpu_custom_call.1} parent=27 // pred_fallthru
          _
      $region28: #{tpu_custom_call.1} parent=5 // pred_fallthru
        _
      %p189 = scmp.le.s32.totalorder 1, %s17
      %p190 = scmp.lt.s32.totalorder %s17, 3
      %p191 = pnand %p189, %p190
      %p192 = pneg %p191
      // Predicated region
      $region33: #{tpu_custom_call.1} parent=5 // pred_check
        _
      $region34: #{tpu_custom_call.1} parent=5 // pred_check_branch
        %194 = sbr.rel (%p191) target = $region36
      $region35: #{tpu_custom_call.1} parent=5 // pred_region
        %s195 = ssub.s32 %s17, 1
        %s196 = sand.u32 %s30, 1
        %s197 = scalar_lea.sflag [#allocation3], %s196
        %s198 = sand.u32 %s30, 1
        %s199 = smul.addr %s198, 8
        %s200 = scalar_lea.vmem [#allocation2], %s199
        // Predicated region
        $region37: #{tpu_custom_call.1} parent=35 // pred_check
          %p201 = pneg %p43
        $region38: #{tpu_custom_call.1} parent=35 // pred_check_branch
          %203 = sbr.rel (%p201) target = $region40
        $region39: #{tpu_custom_call.1} parent=35 // pred_region
          %204 = dma.done %s197, 128
        $region40: #{tpu_custom_call.1} parent=35 // pred_fallthru
          _
        // Predicated region
        $region41: #{tpu_custom_call.1} parent=35 // pred_check
          %p205 = pneg %p64
        $region42: #{tpu_custom_call.1} parent=35 // pred_check_branch
          %207 = sbr.rel (%p205) target = $region44
        $region43: #{tpu_custom_call.1} parent=35 // pred_region
          %208 = dma.done [#allocation6], 8192
        $region44: #{tpu_custom_call.1} parent=35 // pred_fallthru
          _
        %s209 = sand.u32 %s30, 1
        %s210 = scalar_lea.sflag [#allocation3], %s209
        %s211 = sand.u32 %s30, 1
        %s212 = smul.addr %s211, 8
        %s213 = scalar_lea.vmem [#allocation2], %s212
        %p214 = pneg %p43
        %p215 = pneg %p40
        %p216 = pneg %p64
        %p217 = pneg %p61
        %p218 = pneg %p85
        %p219 = pneg %p82
        %p220 = pneg %p106
        %p221 = pneg %p103
        %p222 = pneg %p132
        %p223 = pneg %p129
        %s224 = sand.u32 %s119, 1
        %s225 = scalar_lea.sflag [#allocation4], %s224
        %s226 = sand.u32 %s119, 1
        %s227 = smul.addr %s226, 8
        %s228 = scalar_lea.vmem [#allocation7], %s227
        %v229 = vld [vmem:[%s200] sm:$0xff]
        %v230 = vld [vmem:[#allocation5] sm:$0xff]
        %v231 = vld [vmem:[#allocation5 + $0x8] sm:$0xff]
        %v232 = vld [vmem:[#allocation5 + $0x10] sm:$0xff]
        %v233 = vld [vmem:[#allocation5 + $0x18] sm:$0xff]
        %v234 = vld [vmem:[#allocation5 + $0x20] sm:$0xff]
        %v235 = vld [vmem:[#allocation5 + $0x28] sm:$0xff]
        %v236 = vld [vmem:[#allocation5 + $0x30] sm:$0xff]
        %v237 = vld [vmem:[#allocation5 + $0x38] sm:$0xff]
        %v238 = vld [vmem:[#allocation5 + $0x40] sm:$0xff]
        %v239 = vld [vmem:[#allocation5 + $0x48] sm:$0xff]
        %v240 = vld [vmem:[#allocation5 + $0x50] sm:$0xff]
        %v241 = vld [vmem:[#allocation5 + $0x58] sm:$0xff]
        %v242 = vld [vmem:[#allocation5 + $0x60] sm:$0xff]
        %v243 = vld [vmem:[#allocation5 + $0x68] sm:$0xff]
        %v244 = vld [vmem:[#allocation5 + $0x70] sm:$0xff]
        %v245 = vld [vmem:[#allocation5 + $0x78] sm:$0xff]
        %v246 = vld [vmem:[#allocation5 + $0x80] sm:$0xff]
        %v247 = vld [vmem:[#allocation5 + $0x88] sm:$0xff]
        %v248 = vld [vmem:[#allocation5 + $0x90] sm:$0xff]
        %v249 = vld [vmem:[#allocation5 + $0x98] sm:$0xff]
        %v250 = vld [vmem:[#allocation5 + $0xa0] sm:$0xff]
        %v251 = vld [vmem:[#allocation5 + $0xa8] sm:$0xff]
        %v252 = vld [vmem:[#allocation5 + $0xb0] sm:$0xff]
        %v253 = vld [vmem:[#allocation5 + $0xb8] sm:$0xff]
        %v254 = vld [vmem:[#allocation5 + $0xc0] sm:$0xff]
        %v255 = vld [vmem:[#allocation5 + $0xc8] sm:$0xff]
        %v256 = vld [vmem:[#allocation5 + $0xd0] sm:$0xff]
        %v257 = vld [vmem:[#allocation5 + $0xd8] sm:$0xff]
        %v258 = vld [vmem:[#allocation5 + $0xe0] sm:$0xff]
        %v259 = vld [vmem:[#allocation5 + $0xe8] sm:$0xff]
        %v260 = vld [vmem:[#allocation5 + $0xf0] sm:$0xff]
        %v261 = vld [vmem:[#allocation5 + $0xf8] sm:$0xff]
        %v262 = vld [vmem:[#allocation5 + $0x100] sm:$0xff]
        %v263 = vld [vmem:[#allocation5 + $0x108] sm:$0xff]
        %v264 = vld [vmem:[#allocation5 + $0x110] sm:$0xff]
        %v265 = vld [vmem:[#allocation5 + $0x118] sm:$0xff]
        %v266 = vld [vmem:[#allocation5 + $0x120] sm:$0xff]
        %v267 = vld [vmem:[#allocation5 + $0x128] sm:$0xff]
        %v268 = vld [vmem:[#allocation5 + $0x130] sm:$0xff]
        %v269 = vld [vmem:[#allocation5 + $0x138] sm:$0xff]
        %v270 = vld [vmem:[#allocation5 + $0x140] sm:$0xff]
        %v271 = vld [vmem:[#allocation5 + $0x148] sm:$0xff]
        %v272 = vld [vmem:[#allocation5 + $0x150] sm:$0xff]
        %v273 = vld [vmem:[#allocation5 + $0x158] sm:$0xff]
        %v274 = vld [vmem:[#allocation5 + $0x160] sm:$0xff]
        %v275 = vld [vmem:[#allocation5 + $0x168] sm:$0xff]
        %v276 = vld [vmem:[#allocation5 + $0x170] sm:$0xff]
        %v277 = vld [vmem:[#allocation5 + $0x178] sm:$0xff]
        %v278 = vld [vmem:[#allocation5 + $0x180] sm:$0xff]
        %v279 = vld [vmem:[#allocation5 + $0x188] sm:$0xff]
        %v280 = vld [vmem:[#allocation5 + $0x190] sm:$0xff]
        %v281 = vld [vmem:[#allocation5 + $0x198] sm:$0xff]
        %v282 = vld [vmem:[#allocation5 + $0x1a0] sm:$0xff]
        %v283 = vld [vmem:[#allocation5 + $0x1a8] sm:$0xff]
        %v284 = vld [vmem:[#allocation5 + $0x1b0] sm:$0xff]
        %v285 = vld [vmem:[#allocation5 + $0x1b8] sm:$0xff]
        %v286 = vld [vmem:[#allocation5 + $0x1c0] sm:$0xff]
        %v287 = vld [vmem:[#allocation5 + $0x1c8] sm:$0xff]
        %v288 = vld [vmem:[#allocation5 + $0x1d0] sm:$0xff]
        %v289 = vld [vmem:[#allocation5 + $0x1d8] sm:$0xff]
        %v290 = vld [vmem:[#allocation5 + $0x1e0] sm:$0xff]
        %v291 = vld [vmem:[#allocation5 + $0x1e8] sm:$0xff]
        %v292 = vld [vmem:[#allocation5 + $0x1f0] sm:$0xff]
        %v293 = vld [vmem:[#allocation5 + $0x1f8] sm:$0xff]
        %v295 = vcombine.high %v229, %v229
        %297 = vmatprep.subr.mxu0 %v261
        %298 = vmatpush1.msra.mxu0 %v260
        %299 = vmatprep.subr.mxu0 %v259
        %300 = vmatpush1.msra.mxu0 %v258
        %301 = vmatprep.subr.mxu0 %v257
        %302 = vmatpush1.msra.mxu0 %v256
        %303 = vmatprep.subr.mxu0 %v255
        %304 = vmatpush1.msra.mxu0 %v254
        %305 = vmatprep.subr.mxu0 %v253
        %306 = vmatpush1.msra.mxu0 %v252
        %307 = vmatprep.subr.mxu0 %v251
        %308 = vmatpush1.msra.mxu0 %v250
        %309 = vmatprep.subr.mxu0 %v249
        %310 = vmatpush1.msra.mxu0 %v248
        %311 = vmatprep.subr.mxu0 %v247
        %312 = vmatpush1.msra.mxu0 %v246
        %313 = vmatprep.subr.mxu0 %v245
        %314 = vmatpush1.msra.mxu0 %v244
        %315 = vmatprep.subr.mxu0 %v243
        %316 = vmatpush1.msra.mxu0 %v242
        %317 = vmatprep.subr.mxu0 %v241
        %318 = vmatpush1.msra.mxu0 %v240
        %319 = vmatprep.subr.mxu0 %v239
        %320 = vmatpush1.msra.mxu0 %v238
        %321 = vmatprep.subr.mxu0 %v237
        %322 = vmatpush1.msra.mxu0 %v236
        %323 = vmatprep.subr.mxu0 %v235
        %324 = vmatpush1.msra.mxu0 %v234
        %325 = vmatprep.subr.mxu0 %v233
        %326 = vmatpush1.msra.mxu0 %v232
        %327 = vmatprep.subr.mxu0 %v231
        %328 = vmatpush1.msra.mxu0 %v230
        %329 = vmatprep.subr.mxu0 %v293
        %330 = vmatpush2.msra.mxu0 %v292
        %331 = vmatprep.subr.mxu0 %v291
        %332 = vmatpush2.msra.mxu0 %v290
        %333 = vmatprep.subr.mxu0 %v289
        %334 = vmatpush2.msra.mxu0 %v288
        %335 = vmatprep.subr.mxu0 %v287
        %336 = vmatpush2.msra.mxu0 %v286
        %337 = vmatprep.subr.mxu0 %v285
        %338 = vmatpush2.msra.mxu0 %v284
        %339 = vmatprep.subr.mxu0 %v283
        %340 = vmatpush2.msra.mxu0 %v282
        %341 = vmatprep.subr.mxu0 %v281
        %342 = vmatpush2.msra.mxu0 %v280
        %343 = vmatprep.subr.mxu0 %v279
        %344 = vmatpush2.msra.mxu0 %v278
        %345 = vmatprep.subr.mxu0 %v277
        %346 = vmatpush2.msra.mxu0 %v276
        %347 = vmatprep.subr.mxu0 %v275
        %348 = vmatpush2.msra.mxu0 %v274
        %349 = vmatprep.subr.mxu0 %v273
        %350 = vmatpush2.msra.mxu0 %v272
        %351 = vmatprep.subr.mxu0 %v271
        %352 = vmatpush2.msra.mxu0 %v270
        %353 = vmatprep.subr.mxu0 %v269
        %354 = vmatpush2.msra.mxu0 %v268
        %355 = vmatprep.subr.mxu0 %v267
        %356 = vmatpush2.msra.mxu0 %v266
        %357 = vmatprep.subr.mxu0 %v265
        %358 = vmatpush2.msra.mxu0 %v264
        %359 = vmatprep.subr.mxu0 %v263
        %360 = vmatpush2.msra.mxu0 %v262
        %361 = vmatprep.mubr.f32.mxu0 %v295
        %362 = vmatmul.mubr.f32.gmra.mxu0 %v229
        %v363 = vpop.f32.mrf.mxu0
        %v364 = vadd.f32 0.0, %v363
        %v365 = vpop.f32.mrf.mxu0
        %v366 = vadd.f32 0.0, %v365
        %367 = vdwg.mxu0
        %v368 = vld [vmem:[%s2] sm:$0xf]
        %370 = vset.pattern.permute.xlu0 0
        %371 = vperm.xlu0 %370, %v368
        %v372 = vpop.permute.xlu0 %371
        %v374 = vunpack.c.l.s4 839922192
        %v375 = vunpack.c.0.s8 %v374
        %v376 = vlaneseq
        %v377 = vshrl.u32 %v376, 7
        %v378 = vsub.s32 %v375, %v377
        %v379 = vrot.slane %v372, %v378
        %v381 = vmul.f32 %v229, %v379
        %v382 = vld [vmem:[%s3] sm:$0xf]
        %384 = vset.pattern.permute.xlu0 0
        %385 = vperm.xlu0 %384, %v382
        %v386 = vpop.permute.xlu0 %385
        %v388 = vmul.f32 %v364, %v386
        %v389 = vmul.f32 %v366, %v386
        %v392 = vcombine.low %v388, %v389
        %v394 = vadd.f32 %v381, %v392
        %395 = vst [vmem:[%s228] sm:$0xff] %v394
        %s396 = sand.u32 %s119, 1
        %s397 = scalar_lea.sflag [#allocation4], %s396
        %s398 = sand.u32 %s119, 1
        %s399 = smul.addr %s398, 8
        %s400 = scalar_lea.vmem [#allocation7], %s399
        // Predicated region
        $region45: #{tpu_custom_call.1} parent=35 // pred_check
          %p401 = pneg %p129
        $region46: #{tpu_custom_call.1} parent=35 // pred_check_branch
          %403 = sbr.rel (%p401) target = $region48
        $region47: #{tpu_custom_call.1} parent=35 // pred_region
          %s405 = ssub.s32 128, 128
          %406 = vsyncadd %s397, %s405
          %s407 = smul.addr %s22, 2
          %s408 = smul.addr %s407, 64
          %s409 = scalar_lea.hbm %s4, %s408
          %s411 = sshll.u32 %s400, 4
          %s412 = int_to_ptr.vmem [resolvable:$true] %s411
          %414 = dma.vmem_to_hbm [thread:$0]  %s412, 128, %s409, %s397
        $region48: #{tpu_custom_call.1} parent=35 // pred_fallthru
          _
      $region36: #{tpu_custom_call.1} parent=5 // pred_fallthru
        _
      %p415 = scmp.le.s32.totalorder 2, %s17
      // Predicated region
      $region49: #{tpu_custom_call.1} parent=5 // pred_check
        %p416 = pneg %p415
      $region50: #{tpu_custom_call.1} parent=5 // pred_check_branch
        %418 = sbr.rel (%p416) target = $region52
      $region51: #{tpu_custom_call.1} parent=5 // pred_region
        %s419 = ssub.s32 %s17, 2
        // Predicated region
        $region53: #{tpu_custom_call.1} parent=51 // pred_check
          %p420 = pneg %p135
        $region54: #{tpu_custom_call.1} parent=51 // pred_check_branch
          %422 = sbr.rel (%p420) target = $region56
        $region55: #{tpu_custom_call.1} parent=51 // pred_region
          %s423 = sand.u32 %s120, 1
          %s424 = scalar_lea.sflag [#allocation4], %s423
          %s425 = sand.u32 %s120, 1
          %s426 = smul.addr %s425, 8
          %s427 = scalar_lea.vmem [#allocation7], %s426
          %428 = dma.done %s424, 128
        $region56: #{tpu_custom_call.1} parent=51 // pred_fallthru
          _
      $region52: #{tpu_custom_call.1} parent=5 // pred_fallthru
        _
    $region6: #{tpu_custom_call.1} parent=1 // loop_footer
      %s21 = sadd.s32 1, %s17
    $region7: #{tpu_custom_call.1} parent=1 // loop_footer_branch
      %16 = sbr.rel target = $region3
    $region8: #{tpu_custom_call.1} parent=1 // loop_exit
      _
    %429 = vsyncpa [#allocation3], 1
    %s430 = scalar_lea.sflag [#allocation3], 1
    %431 = vsyncpa %s430, 1
    %432 = vsyncpa [#allocation6], 1
    %433 = vsyncpa [#allocation4], 1
    %s434 = scalar_lea.sflag [#allocation4], 1
    %435 = vsyncpa %s434, 1

</llo_original>
